<compile_context>
chip_gen: v7x
topology: tpu7x:2x2x1
jax: 0.10.0
libtpu: 0.0.40
codegen_flags: <defaults>
</compile_context>

<pallas_src>
import math

import jax
import jax.numpy as jnp
from jax import lax
from jax.experimental import pallas as pl
from jax.experimental.pallas import tpu as pltpu

_INV_SQRT2 = 0.7071067811865476  # 1/sqrt(2), trace-time constant


def _gelu_exact(x):
    # PyTorch nn.GELU() default: 0.5 * x * (1 + erf(x / sqrt(2)))
    return 0.5 * x * (1.0 + lax.erf(x * _INV_SQRT2))


# ----------------------------------------------------------------------------
# Kernel
# ----------------------------------------------------------------------------
def dino_head_kernel(x_ref, w1_ref, b1_ref, w2_ref, b2_ref, w3_ref, b3_ref,
                     v_ref, inv_vnorm_ref, o_ref, z_scr):
    # ---- MLP + L2 normalize: once per batch tile (first out_dim tile) ------
    # Depends on grid axis 1 being innermost & sequential ("arbitrary").
    @pl.when(pl.program_id(1) == 0)
    def _():
        x = x_ref[...]
        h = jnp.dot(x.astype(w1_ref.dtype), w1_ref[...],
                    preferred_element_type=jnp.float32) + b1_ref[...]
        h = _gelu_exact(h)
        h = jnp.dot(h.astype(w2_ref.dtype), w2_ref[...],
                    preferred_element_type=jnp.float32) + b2_ref[...]
        h = _gelu_exact(h)
        z = jnp.dot(h.astype(w3_ref.dtype), w3_ref[...],
                    preferred_element_type=jnp.float32) + b3_ref[...]
        # F.normalize(z, p=2, dim=-1, eps=1e-12)  ==  z / max(||z||, 1e-12)
        inv_znorm = lax.rsqrt(
            jnp.maximum(jnp.sum(z * z, axis=-1, keepdims=True), 1e-24))
        # Store already cast to v's dtype: one cast per batch tile instead of
        # one per out_dim tile, and half the scratch when v is bf16.
        z_scr[...] = (z * inv_znorm).astype(z_scr.dtype)

    # ---- weight-normalized last layer (g == 1): (z @ v) * 1/||v_col|| ------
    o_ref[...] = (jnp.dot(z_scr[...], v_ref[...],
                          preferred_element_type=jnp.float32)
                  * inv_vnorm_ref[...]).astype(o_ref.dtype)


# ----------------------------------------------------------------------------
# VMEM budgeting helpers
# ----------------------------------------------------------------------------
def _round_up(n, m):
    return (n + m - 1) // m * m


def _padded_block_bytes(shape, dtype):
    """VMEM footprint of one buffer of a block (lane/sublane padded)."""
    itemsize = jnp.dtype(dtype).itemsize
    sublane = {4: 8, 2: 16, 1: 32}.get(itemsize, 8)
    shape = list(shape)
    shape[-1] = _round_up(shape[-1], 128)
    if len(shape) >= 2:
        shape[-2] = _round_up(shape[-2], sublane)
    return math.prod(shape) * itemsize


# ----------------------------------------------------------------------------
# Parameters
# ----------------------------------------------------------------------------
def _inv_vnorm(v, eps=1e-12):
    vf = v.astype(jnp.float32)
    # eps clamp so an all-zero column cannot produce Inf/NaN.
    return lax.rsqrt(jnp.maximum(jnp.sum(vf * vf, axis=0, keepdims=True),
                                 eps * eps))


def prepare_params(params):
    """One-time parameter prep: cache 1/||v_col|| so every forward call does
    not re-read the full [bottleneck, out_dim] matrix outside the kernel."""
    if "inv_vnorm" not in params:
        params = dict(params, inv_vnorm=_inv_vnorm(params["v_last"]))
    return params


def init_params(key, in_dim, hidden_dim, bottleneck_dim, out_dim,
                weight_dtype=jnp.bfloat16, v_dtype=None):
    """Synthetic init mimicking trunc_normal_(std=0.02), zero bias.

    Weights stored pre-transposed as [in_features, out_features] so every
    layer is x @ W on the MXU.  Default bf16 storage (f32 accumulation in the
    kernel) per the perf review; pass weight_dtype=jnp.float32 for exact f32.
    """
    if v_dtype is None:
        v_dtype = weight_dtype
    ks = jax.random.split(key, 4)

    def tn_init(k, shape, std=0.02):
        return jax.random.truncated_normal(k, -2.0, 2.0, shape, jnp.float32) * std

    w1 = tn_init(ks[0], (in_dim, hidden_dim)).astype(weight_dtype)
    w2 = tn_init(ks[1], (hidden_dim, hidden_dim)).astype(weight_dtype)
    w3 = tn_init(ks[2], (hidden_dim, bottleneck_dim)).astype(weight_dtype)
    b1 = jnp.zeros((1, hidden_dim), jnp.float32)
    b2 = jnp.zeros((1, hidden_dim), jnp.float32)
    b3 = jnp.zeros((1, bottleneck_dim), jnp.float32)
    # weight_norm direction tensor v (PyTorch last_layer keeps default init).
    v_last = (jax.random.normal(ks[3], (bottleneck_dim, out_dim), jnp.float32)
              * 0.1).astype(v_dtype)
    return prepare_params(dict(w1=w1, b1=b1, w2=w2, b2=b2, w3=w3, b3=b3,
                               v_last=v_last))


# ----------------------------------------------------------------------------
# Forward wrapper
# ----------------------------------------------------------------------------
def dino_head_forward(x, params, *, tm=None, tn=None,
                      out_dtype=jnp.float32, vmem_limit_bytes=None):
    """x: [B, in_dim].  params: dict from init_params/prepare_params."""
    params = prepare_params(params)
    w1, b1 = params["w1"], params["b1"]
    w2, b2 = params["w2"], params["b2"]
    w3, b3 = params["w3"], params["b3"]
    v, inv_vnorm = params["v_last"], params["inv_vnorm"]

    B, in_dim = x.shape
    hidden = w1.shape[1]
    bottleneck = w3.shape[1]
    out_dim = v.shape[1]

    # Tile heuristics: tm as large as the batch allows (each doubling of tm
    # halves the re-streaming of v_last from HBM); tn a big multiple of 128
    # for lane-dense stores.  Budgeted against v7x's 64 MiB per-TC VMEM with
    # bf16 weights + single-buffered constants.
    if tm is None:
        tm = min(B, 512)
    if tn is None:
        tn = min(out_dim, 2048 if v.dtype != jnp.float32 else 1024)
    assert B % tm == 0 and out_dim % tn == 0, "B / out_dim must divide tiles"
    assert (tm % 8 == 0 or tm == B) and (tn % 128 == 0 or tn == out_dim)

    grid = (B // tm, out_dim // tn)

    # Explicit scoped-VMEM limit from the actual (padded) block footprints,
    # computed for the worst case buffer counts (fallback path), +margin.
    if vmem_limit_bytes is None:
        blocks = [
            ((tm, in_dim), x.dtype, 2),          # x (double-buffered)
            ((in_dim, hidden), w1.dtype, 2),     # w1 (worst case if no hints)
            ((1, hidden), b1.dtype, 2),
            ((hidden, hidden), w2.dtype, 2),
            ((1, hidden), b2.dtype, 2),
            ((hidden, bottleneck), w3.dtype, 2),
            ((1, bottleneck), b3.dtype, 2),
            ((bottleneck, tn), v.dtype, 3),      # v_last (Buffered(3))
            ((1, tn), inv_vnorm.dtype, 2),
            ((tm, tn), out_dtype, 2),            # output
            ((tm, bottleneck), v.dtype, 1),      # z_scr scratch
        ]
        need = sum(_padded_block_bytes(s, d) * n for s, d, n in blocks)
        vmem_limit_bytes = int(min(128 * 1024 * 1024,
                                   max(need * 5 // 4 + (4 << 20), 16 << 20)))

    def build(use_buffer_hints):
        if use_buffer_hints:
            # Constant-index-map operands never change across the grid: a
            # single buffer is enough (default double buffering is pure waste).
            def const_spec(shape):
                return pl.BlockSpec(shape, lambda i, j: (0, 0),
                                    pipeline_mode=pl.Buffered(1))
            v_spec = pl.BlockSpec((bottleneck, tn), lambda i, j: (0, j),
                                  pipeline_mode=pl.Buffered(3))
        else:
            def const_spec(shape):
                return pl.BlockSpec(shape, lambda i, j: (0, 0))
            v_spec = pl.BlockSpec((bottleneck, tn), lambda i, j: (0, j))

        return pl.pallas_call(
            dino_head_kernel,
            out_shape=jax.ShapeDtypeStruct((B, out_dim), out_dtype),
            grid_spec=pltpu.PrefetchScalarGridSpec(
                num_scalar_prefetch=0,
                grid=grid,
                in_specs=[
                    pl.BlockSpec((tm, in_dim), lambda i, j: (i, 0)),   # x
                    const_spec((in_dim, hidden)),                       # w1
                    const_spec((1, hidden)),                            # b1
                    const_spec((hidden, hidden)),                       # w2
                    const_spec((1, hidden)),                            # b2
                    const_spec((hidden, bottleneck)),                   # w3
                    const_spec((1, bottleneck)),                        # b3
                    v_spec,                                             # v_last
                    pl.BlockSpec((1, tn), lambda i, j: (0, j)),         # 1/||v||
                ],
                out_specs=pl.BlockSpec((tm, tn), lambda i, j: (i, j)),
                # z_scr lives in v's dtype (see kernel).
                scratch_shapes=[pltpu.VMEM((tm, bottleneck), v.dtype)],
            ),
            # Batch tiles shard across TensorCores; the out_dim axis MUST stay
            # sequential ("arbitrary") for the j==0 prologue + z_scr reuse.
            compiler_params=pltpu.CompilerParams(
                dimension_semantics=("parallel", "arbitrary"),
                vmem_limit_bytes=vmem_limit_bytes),
        )

    args = (x, w1, b1, w2, b2, w3, b3, v, inv_vnorm)
    try:
        return build(True)(*args)
    except Exception:
        # Older Pallas without pipeline_mode / Buffered(1): fall back to the
        # default double-buffered specs (correctness identical).
        return build(False)(*args)


# ----------------------------------------------------------------------------
# Pure-JAX reference (same mixed-precision contract as the kernel)
# ----------------------------------------------------------------------------
def reference_forward(x, params):
    params = prepare_params(params)

    def mm(a, w):
        return jnp.dot(a.astype(w.dtype), w, preferred_element_type=jnp.float32)

    h = _gelu_exact(mm(x, params["w1"]) + params["b1"])
    h = _gelu_exact(mm(h, params["w2"]) + params["b2"])
    z = mm(h, params["w3"]) + params["b3"]
    z = z * lax.rsqrt(jnp.maximum(jnp.sum(z * z, -1, keepdims=True), 1e-24))
    return mm(z, params["v_last"]) * params["inv_vnorm"]


# ----------------------------------------------------------------------------
# Demo / self-test (small, tile-friendly shapes; real head is
# in=2048, hidden=2048, bottleneck=256, out=65536)
# ----------------------------------------------------------------------------
if __name__ == "__main__":
    B, in_dim, hidden_dim, bottleneck_dim, out_dim = 16, 128, 256, 128, 512

    key = jax.random.PRNGKey(0)
    kx, kp = jax.random.split(key)
    x = jax.random.normal(kx, (B, in_dim), jnp.float32)

    # --- f32 weights: tight tolerance ---------------------------------------
    p_f32 = init_params(kp, in_dim, hidden_dim, bottleneck_dim, out_dim,
                        weight_dtype=jnp.float32)
    out = jax.block_until_ready(dino_head_forward(x, p_f32, tm=8, tn=128))
    ref = reference_forward(x, p_f32)
    assert out.shape == (B, out_dim) and out.dtype == jnp.float32
    assert jnp.allclose(out, ref, atol=1e-4, rtol=1e-4), "f32 mismatch vs ref"

    # --- bf16 weights (default / recommended storage) -----------------------
    p_bf16 = init_params(kp, in_dim, hidden_dim, bottleneck_dim, out_dim,
                         weight_dtype=jnp.bfloat16)
    out_b = jax.block_until_ready(dino_head_forward(x, p_bf16, tm=8, tn=128))
    ref_b = reference_forward(x, p_bf16)
    assert jnp.allclose(out_b, ref_b, atol=2e-3, rtol=2e-3), "bf16 mismatch"

    # --- bf16 output (halves writeback; only if downstream loss tolerates) --
    out_bo = jax.block_until_ready(
        dino_head_forward(x, p_bf16, tm=8, tn=128, out_dtype=jnp.bfloat16))
    assert out_bo.dtype == jnp.bfloat16
    assert jnp.allclose(out_bo.astype(jnp.float32), ref_b,
                        atol=2e-2, rtol=2e-2), "bf16-output mismatch"

    print("KERNEL_OK")
</pallas_src>

<mosaic_0001>
module attributes {stable_mosaic.version = 11 : i64} {
  func.func @dino_head_kernel(%arg0: i32, %arg1: i32, %arg2: memref<8x128xf32, #tpu.memory_space<vmem>>, %arg3: memref<128x256xf32, #tpu.memory_space<vmem>>, %arg4: memref<1x256xf32, #tpu.memory_space<vmem>>, %arg5: memref<256x256xf32, #tpu.memory_space<vmem>>, %arg6: memref<1x256xf32, #tpu.memory_space<vmem>>, %arg7: memref<256x128xf32, #tpu.memory_space<vmem>>, %arg8: memref<1x128xf32, #tpu.memory_space<vmem>>, %arg9: memref<128x128xf32, #tpu.memory_space<vmem>>, %arg10: memref<1x128xf32, #tpu.memory_space<vmem>>, %arg11: memref<8x128xf32, #tpu.memory_space<vmem>>, %arg12: memref<8x128xf32, #tpu.memory_space<vmem>>) attributes {dimension_semantics = [#tpu.dimension_semantics<parallel>, #tpu.dimension_semantics<arbitrary>], iteration_bounds = array<i64: 2, 4>, scalar_prefetch = 0 : i64, scratch_operands = 1 : i64, tpu.core_type = #tpu.core_type<tc>, window_params = [{transform_indices = @transform_0, window_bounds = array<i64: 8, 128>}, {pipeline_mode = #tpu.pipeline_mode<synchronous>, transform_indices = @transform_1, window_bounds = array<i64: 128, 256>}, {pipeline_mode = #tpu.pipeline_mode<synchronous>, transform_indices = @transform_2, window_bounds = array<i64: 1, 256>}, {pipeline_mode = #tpu.pipeline_mode<synchronous>, transform_indices = @transform_3, window_bounds = array<i64: 256, 256>}, {pipeline_mode = #tpu.pipeline_mode<synchronous>, transform_indices = @transform_4, window_bounds = array<i64: 1, 256>}, {pipeline_mode = #tpu.pipeline_mode<synchronous>, transform_indices = @transform_5, window_bounds = array<i64: 256, 128>}, {pipeline_mode = #tpu.pipeline_mode<synchronous>, transform_indices = @transform_6, window_bounds = array<i64: 1, 128>}, {transform_indices = @transform_7, window_bounds = array<i64: 128, 128>}, {transform_indices = @transform_8, window_bounds = array<i64: 1, 128>}, {transform_indices = @transform_9, window_bounds = array<i64: 8, 128>}]} {
    %c0_i32 = arith.constant 0 : i32
    %0 = arith.cmpi eq, %arg1, %c0_i32 : i32
    %1 = arith.extui %0 : i1 to i32
    %c0_i32_0 = arith.constant 0 : i32
    %2 = arith.cmpi ne, %1, %c0_i32_0 : i32
    scf.if %2 {
      %c0_8 = arith.constant 0 : index
      %c0_9 = arith.constant 0 : index
      %10 = vector.load %arg2[%c0_8, %c0_9] : memref<8x128xf32, #tpu.memory_space<vmem>>, vector<8x128xf32>
      %c0_10 = arith.constant 0 : index
      %c0_11 = arith.constant 0 : index
      %11 = vector.load %arg3[%c0_10, %c0_11] : memref<128x256xf32, #tpu.memory_space<vmem>>, vector<128x256xf32>
      %cst_12 = arith.constant dense<0.000000e+00> : vector<8x256xf32>
      %12 = tpu.matmul %10, %11, %cst_12 {dimension_numbers = #tpu.dot_dimension_numbers<[1], [0], [0], [1], [0, 0, 1, 1], [], []>} : vector<8x128xf32>, vector<128x256xf32>, vector<8x256xf32> -> vector<8x256xf32>
      %c0_13 = arith.constant 0 : index
      %c0_14 = arith.constant 0 : index
      %13 = vector.load %arg4[%c0_13, %c0_14] : memref<1x256xf32, #tpu.memory_space<vmem>>, vector<1x256xf32>
      %14 = vector.broadcast %13 : vector<1x256xf32> to vector<8x256xf32>
      %15 = arith.addf %12, %14 : vector<8x256xf32>
      %cst_15 = arith.constant 5.000000e-01 : f32
      %16 = vector.broadcast %cst_15 : f32 to vector<8x256xf32>
      %17 = arith.mulf %16, %15 : vector<8x256xf32>
      %cst_16 = arith.constant 0.707106769 : f32
      %18 = vector.broadcast %cst_16 : f32 to vector<8x256xf32>
      %19 = arith.mulf %15, %18 : vector<8x256xf32>
      %20 = math.erf %19 : vector<8x256xf32>
      %cst_17 = arith.constant 1.000000e+00 : f32
      %21 = vector.broadcast %cst_17 : f32 to vector<8x256xf32>
      %22 = arith.addf %21, %20 : vector<8x256xf32>
      %23 = arith.mulf %17, %22 : vector<8x256xf32>
      %c0_18 = arith.constant 0 : index
      %c0_19 = arith.constant 0 : index
      %24 = vector.load %arg5[%c0_18, %c0_19] : memref<256x256xf32, #tpu.memory_space<vmem>>, vector<256x256xf32>
      %cst_20 = arith.constant dense<0.000000e+00> : vector<8x256xf32>
      %25 = tpu.matmul %23, %24, %cst_20 {dimension_numbers = #tpu.dot_dimension_numbers<[1], [0], [0], [1], [0, 0, 1, 1], [], []>} : vector<8x256xf32>, vector<256x256xf32>, vector<8x256xf32> -> vector<8x256xf32>
      %c0_21 = arith.constant 0 : index
      %c0_22 = arith.constant 0 : index
      %26 = vector.load %arg6[%c0_21, %c0_22] : memref<1x256xf32, #tpu.memory_space<vmem>>, vector<1x256xf32>
      %27 = vector.broadcast %26 : vector<1x256xf32> to vector<8x256xf32>
      %28 = arith.addf %25, %27 : vector<8x256xf32>
      %cst_23 = arith.constant 5.000000e-01 : f32
      %29 = vector.broadcast %cst_23 : f32 to vector<8x256xf32>
      %30 = arith.mulf %29, %28 : vector<8x256xf32>
      %cst_24 = arith.constant 0.707106769 : f32
      %31 = vector.broadcast %cst_24 : f32 to vector<8x256xf32>
      %32 = arith.mulf %28, %31 : vector<8x256xf32>
      %33 = math.erf %32 : vector<8x256xf32>
      %cst_25 = arith.constant 1.000000e+00 : f32
      %34 = vector.broadcast %cst_25 : f32 to vector<8x256xf32>
      %35 = arith.addf %34, %33 : vector<8x256xf32>
      %36 = arith.mulf %30, %35 : vector<8x256xf32>
      %c0_26 = arith.constant 0 : index
      %c0_27 = arith.constant 0 : index
      %37 = vector.load %arg7[%c0_26, %c0_27] : memref<256x128xf32, #tpu.memory_space<vmem>>, vector<256x128xf32>
      %cst_28 = arith.constant dense<0.000000e+00> : vector<8x128xf32>
      %38 = tpu.matmul %36, %37, %cst_28 {dimension_numbers = #tpu.dot_dimension_numbers<[1], [0], [0], [1], [0, 0, 1, 1], [], []>} : vector<8x256xf32>, vector<256x128xf32>, vector<8x128xf32> -> vector<8x128xf32>
      %c0_29 = arith.constant 0 : index
      %c0_30 = arith.constant 0 : index
      %39 = vector.load %arg8[%c0_29, %c0_30] : memref<1x128xf32, #tpu.memory_space<vmem>>, vector<1x128xf32>
      %40 = vector.broadcast %39 : vector<1x128xf32> to vector<8x128xf32>
      %41 = arith.addf %38, %40 : vector<8x128xf32>
      %42 = arith.mulf %41, %41 : vector<8x128xf32>
      %cst_31 = arith.constant dense<0.000000e+00> : vector<8xf32>
      %43 = vector.multi_reduction <add>, %42, %cst_31 [1] : vector<8x128xf32> to vector<8xf32>
      %44 = vector.shape_cast %43 : vector<8xf32> to vector<8x1xf32>
      %cst_32 = arith.constant 1.000000e-24 : f32
      %45 = vector.broadcast %cst_32 : f32 to vector<8x1xf32>
      %46 = arith.maximumf %44, %45 : vector<8x1xf32>
      %47 = math.rsqrt %46 : vector<8x1xf32>
      %48 = vector.broadcast %47 : vector<8x1xf32> to vector<8x128xf32>
      %49 = arith.mulf %41, %48 : vector<8x128xf32>
      %c0_33 = arith.constant 0 : index
      %c0_34 = arith.constant 0 : index
      %50 = vector.load %arg12[%c0_33, %c0_34] : memref<8x128xf32, #tpu.memory_space<vmem>>, vector<8x128xf32>
      tpu.vector_store %arg12[%c0_33, %c0_34], %49 {strides = array<i32>} : memref<8x128xf32, #tpu.memory_space<vmem>>, vector<8x128xf32>,
    } else {
    }
    %c0 = arith.constant 0 : index
    %c0_1 = arith.constant 0 : index
    %3 = vector.load %arg12[%c0, %c0_1] : memref<8x128xf32, #tpu.memory_space<vmem>>, vector<8x128xf32>
    %c0_2 = arith.constant 0 : index
    %c0_3 = arith.constant 0 : index
    %4 = vector.load %arg9[%c0_2, %c0_3] : memref<128x128xf32, #tpu.memory_space<vmem>>, vector<128x128xf32>
    %cst = arith.constant dense<0.000000e+00> : vector<8x128xf32>
    %5 = tpu.matmul %3, %4, %cst {dimension_numbers = #tpu.dot_dimension_numbers<[1], [0], [0], [1], [0, 0, 1, 1], [], []>} : vector<8x128xf32>, vector<128x128xf32>, vector<8x128xf32> -> vector<8x128xf32>
    %c0_4 = arith.constant 0 : index
    %c0_5 = arith.constant 0 : index
    %6 = vector.load %arg10[%c0_4, %c0_5] : memref<1x128xf32, #tpu.memory_space<vmem>>, vector<1x128xf32>
    %7 = vector.broadcast %6 : vector<1x128xf32> to vector<8x128xf32>
    %8 = arith.mulf %5, %7 : vector<8x128xf32>
    %c0_6 = arith.constant 0 : index
    %c0_7 = arith.constant 0 : index
    %9 = vector.load %arg11[%c0_6, %c0_7] : memref<8x128xf32, #tpu.memory_space<vmem>>, vector<8x128xf32>
    tpu.vector_store %arg11[%c0_6, %c0_7], %8 {strides = array<i32>} : memref<8x128xf32, #tpu.memory_space<vmem>>, vector<8x128xf32>,
    return
  }
  func.func @transform_0(%arg0: i32, %arg1: i32) -> (i32, i32) {
    %c0_i32 = arith.constant 0 : i32
    %c0_i32_0 = arith.constant 0 : i32
    return %arg0, %c0_i32 : i32, i32
  }
  func.func @transform_1(%arg0: i32, %arg1: i32) -> (i32, i32) {
    %c0_i32 = arith.constant 0 : i32
    %c0_i32_0 = arith.constant 0 : i32
    %c0_i32_1 = arith.constant 0 : i32
    return %c0_i32, %c0_i32_0 : i32, i32
  }
  func.func @transform_2(%arg0: i32, %arg1: i32) -> (i32, i32) {
    %c0_i32 = arith.constant 0 : i32
    %c0_i32_0 = arith.constant 0 : i32
    %c0_i32_1 = arith.constant 0 : i32
    return %c0_i32, %c0_i32_0 : i32, i32
  }
  func.func @transform_3(%arg0: i32, %arg1: i32) -> (i32, i32) {
    %c0_i32 = arith.constant 0 : i32
    %c0_i32_0 = arith.constant 0 : i32
    %c0_i32_1 = arith.constant 0 : i32
    return %c0_i32, %c0_i32_0 : i32, i32
  }
  func.func @transform_4(%arg0: i32, %arg1: i32) -> (i32, i32) {
    %c0_i32 = arith.constant 0 : i32
    %c0_i32_0 = arith.constant 0 : i32
    %c0_i32_1 = arith.constant 0 : i32
    return %c0_i32, %c0_i32_0 : i32, i32
  }
  func.func @transform_5(%arg0: i32, %arg1: i32) -> (i32, i32) {
    %c0_i32 = arith.constant 0 : i32
    %c0_i32_0 = arith.constant 0 : i32
    %c0_i32_1 = arith.constant 0 : i32
    return %c0_i32, %c0_i32_0 : i32, i32
  }
  func.func @transform_6(%arg0: i32, %arg1: i32) -> (i32, i32) {
    %c0_i32 = arith.constant 0 : i32
    %c0_i32_0 = arith.constant 0 : i32
    %c0_i32_1 = arith.constant 0 : i32
    return %c0_i32, %c0_i32_0 : i32, i32
  }
  func.func @transform_7(%arg0: i32, %arg1: i32) -> (i32, i32) {
    %c0_i32 = arith.constant 0 : i32
    %c0_i32_0 = arith.constant 0 : i32
    return %c0_i32, %arg1 : i32, i32
  }
  func.func @transform_8(%arg0: i32, %arg1: i32) -> (i32, i32) {
    %c0_i32 = arith.constant 0 : i32
    %c0_i32_0 = arith.constant 0 : i32
    return %c0_i32, %arg1 : i32, i32
  }
  func.func @transform_9(%arg0: i32, %arg1: i32) -> (i32, i32) {
    %c0_i32 = arith.constant 0 : i32
    return %arg0, %arg1 : i32, i32
  }
}

</mosaic_0001>

<llo_original>
// kernel: tpu_custom_call.1
$region0: #{tpu_custom_call.1}
  #allocation0 [shape = 'u32[]', space=smem, size = 0x4, offset = 0x4, fixed_abs, tag = 'smem constant byte address 0x4 - core index']
  #allocation1 [shape = 'u32[144,128]{1,0:T(1,128)}', space=vmem, size = 0x12000, scoped, tag = 'internal scratch']
  #allocation2 [shape = 'f32[8,128]{1,0:T(8,128)}', space=vmem, size = 0x1000, scoped, tag = 'scratch operand']
  %s0 = inlined_call_operand.hbm [shape: f32[16,128], index: 0, kind: input, shape index: {}]
  %s1 = inlined_call_operand.hbm [shape: f32[128,256], index: 1, kind: input, shape index: {}]
  %s2 = inlined_call_operand.vmem [shape: f32[1,256], index: 2, kind: input, shape index: {}]
  %s3 = inlined_call_operand.hbm [shape: f32[256,256], index: 3, kind: input, shape index: {}]
  %s4 = inlined_call_operand.vmem [shape: f32[1,256], index: 4, kind: input, shape index: {}]
  %s5 = inlined_call_operand.hbm [shape: f32[256,128], index: 5, kind: input, shape index: {}]
  %s6 = inlined_call_operand.vmem [shape: f32[1,128], index: 6, kind: input, shape index: {}]
  %s7 = inlined_call_operand.hbm [shape: f32[128,512], index: 7, kind: input, shape index: {}]
  %s8 = inlined_call_operand.vmem [shape: f32[1,512], index: 8, kind: input, shape index: {}]
  %s9 = inlined_call_operand.hbm [shape: f32[16,512], index: 9, kind: output, shape index: {}]
  %s10 = sld [smem:[#allocation0]]
  $region93: #{tpu_custom_call.1} parent=0
    _
  %s12 = ssub.s32 1, %s10
  %s13 = scalar_select 0, %s12, %s10
  $region1: #{tpu_custom_call.1} parent=0
    #allocation3 [shape = 'u8[8192]{0}', space=vmem, size = 0x2000, scoped, tag = 'input window, operand 0']
    #allocation4 [shape = 's32[2]{0}', space=sflag, size = 0x8, scoped, tag = 'scoped memory for tpu_custom_call.1']
    #allocation5 [shape = 's32[2]{0}', space=sflag, size = 0x8, scoped, tag = 'scoped memory for tpu_custom_call.1']
    #allocation6 [shape = 'u8[131072]{0}', space=vmem, size = 0x20000, scoped, tag = 'input window, operand 1, single buffered']
    #allocation7 [shape = 's32[1]{0}', space=sflag, size = 0x4, scoped, tag = 'scoped memory for tpu_custom_call.1']
    #allocation8 [shape = 'u8[262144]{0}', space=vmem, size = 0x40000, scoped, tag = 'input window, operand 3, single buffered']
    #allocation9 [shape = 'u8[131072]{0}', space=vmem, size = 0x20000, scoped, tag = 'input window, operand 5, single buffered']
    #allocation10 [shape = 's32[1]{0}', space=sflag, size = 0x4, scoped, tag = 'scoped memory for tpu_custom_call.1']
    #allocation11 [shape = 'u8[131072]{0}', space=vmem, size = 0x20000, scoped, tag = 'input window, operand 7']
    #allocation12 [shape = 'u8[8192]{0}', space=vmem, size = 0x2000, scoped, tag = 'output window, operand 0']
    %14 = vsyncpa [#allocation4], 0
    %s15 = scalar_lea.sflag [#allocation4], 1
    %16 = vsyncpa %s15, 0
    %17 = vsyncpa [#allocation7], 0
    %18 = vsyncpa [#allocation10], 0
    %19 = vsyncpa [#allocation5], 0
    %s20 = scalar_lea.sflag [#allocation5], 1
    %21 = vsyncpa %s20, 0
    loop: start=0, step=1, limit=10
    $region2: #{tpu_custom_call.1} parent=1 // loop_pre_header
      _
    $region3: #{tpu_custom_call.1} parent=1 // loop_header
      %s23 = sphi 0, %s27
      %p24 = scmp.ge.s32.totalorder %s23, 10
      %s30 = sphi 0, %s42
      %s31 = sphi 0, %s38
      %s32 = sphi 0, %s30
      %s33 = sphi 0, %s31
      %s34 = sphi 0, %s32
      %s35 = sphi 0, %s33
      %s45 = sphi 0, %s47
      %s48 = sphi 0, %s45
      %s49 = sphi 0, %s48
      %s65 = sphi 0, %s49
      %s69 = sphi 0, %s69
      %s71 = sphi 0, %s69
      %s72 = sphi 0, %s71
      %s86 = sphi 0, %s72
      %s90 = sphi 0, %s90
      %s92 = sphi 0, %s90
      %s93 = sphi 0, %s92
      %s107 = sphi 0, %s93
      %s111 = sphi 0, %s111
      %s113 = sphi 0, %s111
      %s114 = sphi 0, %s113
      %s128 = sphi 0, %s114
      %s132 = sphi 0, %s132
      %s134 = sphi 0, %s132
      %s135 = sphi 0, %s134
      %s149 = sphi 0, %s135
      %s153 = sphi 0, %s153
      %s155 = sphi 0, %s153
      %s156 = sphi 0, %s155
      %s170 = sphi 0, %s156
      %s174 = sphi 0, %s174
      %s176 = sphi 0, %s174
      %s177 = sphi 0, %s176
      %s191 = sphi 0, %s177
      %s197 = sphi 0, %s199
      %s200 = sphi 0, %s197
      %s201 = sphi 0, %s200
      %s217 = sphi 0, %s201
      %s223 = sphi 0, %s225
      %s226 = sphi 0, %s223
      %s227 = sphi 0, %s226
      %s243 = sphi 0, %s227
      %s251 = sphi 0, %s253
      %s254 = sphi 0, %s251
      %s255 = sphi 0, %s254
      %s271 = sphi 0, %s255
    $region4: #{tpu_custom_call.1} parent=1 // loop_header_branch
      %26 = sbr.rel (%p24) target = $region8
    $region5: #{tpu_custom_call.1} parent=1 // loop_body
      %s28 = ssub.s32 %s23, 1
      %s29 = ssub.s32 %s23, 2
      %s36 = sadd.s32 1, %s31
      %p37 = scmp.ge.s32.totalorder %s36, 4
      %s38 = scalar_select %p37, 0, %s36
      %s39 = sadd.s32 1, %s30
      %s40 = scalar_select %p37, %s39, %s30
      %p41 = scmp.ge.s32.totalorder %s40, 2
      %s42 = scalar_select %p41, 0, %s40
      %s43 = ssub.s32 %s30, %s42
      %p44 = scmp.eq.s32.totalorder %s43, 0
      %s46 = sadd.s32 %s45, 1
      %s47 = scalar_select %p44, %s45, %s46
      %p50 = pneg %p44
      %p51 = scmp.eq.s32.totalorder %s23, 7
      %p52 = por %p50, %p51
      %p53 = scmp.ne.s32.totalorder %s45, %s48
      %p54 = scmp.eq.s32.totalorder %s23, 0
      %p55 = por %p53, %p54
      %p56 = scmp.ne.s32.totalorder %s45, %s48
      %p57 = scmp.eq.s32.totalorder %s28, 7
      %p58 = por %p56, %p57
      %p59 = scmp.ne.s32.totalorder %s48, %s49
      %p60 = scmp.eq.s32.totalorder %s28, 0
      %p61 = por %p59, %p60
      %p62 = scmp.ne.s32.totalorder %s48, %s49
      %p63 = scmp.eq.s32.totalorder %s29, 7
      %p64 = por %p62, %p63
      %p66 = scmp.ne.s32.totalorder %s49, %s65
      %p67 = scmp.eq.s32.totalorder %s29, 0
      %p68 = por %p66, %p67
      %s70 = sadd.s32 %s69, 1
      %p73 = scmp.eq.s32.totalorder %s23, 7
      %p74 = scmp.ne.s32.totalorder %s69, %s71
      %p75 = scmp.eq.s32.totalorder %s23, 0
      %p76 = por %p74, %p75
      %p77 = scmp.ne.s32.totalorder %s69, %s71
      %p78 = scmp.eq.s32.totalorder %s28, 7
      %p79 = por %p77, %p78
      %p80 = scmp.ne.s32.totalorder %s71, %s72
      %p81 = scmp.eq.s32.totalorder %s28, 0
      %p82 = por %p80, %p81
      %p83 = scmp.ne.s32.totalorder %s71, %s72
      %p84 = scmp.eq.s32.totalorder %s29, 7
      %p85 = por %p83, %p84
      %p87 = scmp.ne.s32.totalorder %s72, %s86
      %p88 = scmp.eq.s32.totalorder %s29, 0
      %p89 = por %p87, %p88
      %s91 = sadd.s32 %s90, 1
      %p94 = scmp.eq.s32.totalorder %s23, 7
      %p95 = scmp.ne.s32.totalorder %s90, %s92
      %p96 = scmp.eq.s32.totalorder %s23, 0
      %p97 = por %p95, %p96
      %p98 = scmp.ne.s32.totalorder %s90, %s92
      %p99 = scmp.eq.s32.totalorder %s28, 7
      %p100 = por %p98, %p99
      %p101 = scmp.ne.s32.totalorder %s92, %s93
      %p102 = scmp.eq.s32.totalorder %s28, 0
      %p103 = por %p101, %p102
      %p104 = scmp.ne.s32.totalorder %s92, %s93
      %p105 = scmp.eq.s32.totalorder %s29, 7
      %p106 = por %p104, %p105
      %p108 = scmp.ne.s32.totalorder %s93, %s107
      %p109 = scmp.eq.s32.totalorder %s29, 0
      %p110 = por %p108, %p109
      %s112 = sadd.s32 %s111, 1
      %p115 = scmp.eq.s32.totalorder %s23, 7
      %p116 = scmp.ne.s32.totalorder %s111, %s113
      %p117 = scmp.eq.s32.totalorder %s23, 0
      %p118 = por %p116, %p117
      %p119 = scmp.ne.s32.totalorder %s111, %s113
      %p120 = scmp.eq.s32.totalorder %s28, 7
      %p121 = por %p119, %p120
      %p122 = scmp.ne.s32.totalorder %s113, %s114
      %p123 = scmp.eq.s32.totalorder %s28, 0
      %p124 = por %p122, %p123
      %p125 = scmp.ne.s32.totalorder %s113, %s114
      %p126 = scmp.eq.s32.totalorder %s29, 7
      %p127 = por %p125, %p126
      %p129 = scmp.ne.s32.totalorder %s114, %s128
      %p130 = scmp.eq.s32.totalorder %s29, 0
      %p131 = por %p129, %p130
      %s133 = sadd.s32 %s132, 1
      %p136 = scmp.eq.s32.totalorder %s23, 7
      %p137 = scmp.ne.s32.totalorder %s132, %s134
      %p138 = scmp.eq.s32.totalorder %s23, 0
      %p139 = por %p137, %p138
      %p140 = scmp.ne.s32.totalorder %s132, %s134
      %p141 = scmp.eq.s32.totalorder %s28, 7
      %p142 = por %p140, %p141
      %p143 = scmp.ne.s32.totalorder %s134, %s135
      %p144 = scmp.eq.s32.totalorder %s28, 0
      %p145 = por %p143, %p144
      %p146 = scmp.ne.s32.totalorder %s134, %s135
      %p147 = scmp.eq.s32.totalorder %s29, 7
      %p148 = por %p146, %p147
      %p150 = scmp.ne.s32.totalorder %s135, %s149
      %p151 = scmp.eq.s32.totalorder %s29, 0
      %p152 = por %p150, %p151
      %s154 = sadd.s32 %s153, 1
      %p157 = scmp.eq.s32.totalorder %s23, 7
      %p158 = scmp.ne.s32.totalorder %s153, %s155
      %p159 = scmp.eq.s32.totalorder %s23, 0
      %p160 = por %p158, %p159
      %p161 = scmp.ne.s32.totalorder %s153, %s155
      %p162 = scmp.eq.s32.totalorder %s28, 7
      %p163 = por %p161, %p162
      %p164 = scmp.ne.s32.totalorder %s155, %s156
      %p165 = scmp.eq.s32.totalorder %s28, 0
      %p166 = por %p164, %p165
      %p167 = scmp.ne.s32.totalorder %s155, %s156
      %p168 = scmp.eq.s32.totalorder %s29, 7
      %p169 = por %p167, %p168
      %p171 = scmp.ne.s32.totalorder %s156, %s170
      %p172 = scmp.eq.s32.totalorder %s29, 0
      %p173 = por %p171, %p172
      %s175 = sadd.s32 %s174, 1
      %p178 = scmp.eq.s32.totalorder %s23, 7
      %p179 = scmp.ne.s32.totalorder %s174, %s176
      %p180 = scmp.eq.s32.totalorder %s23, 0
      %p181 = por %p179, %p180
      %p182 = scmp.ne.s32.totalorder %s174, %s176
      %p183 = scmp.eq.s32.totalorder %s28, 7
      %p184 = por %p182, %p183
      %p185 = scmp.ne.s32.totalorder %s176, %s177
      %p186 = scmp.eq.s32.totalorder %s28, 0
      %p187 = por %p185, %p186
      %p188 = scmp.ne.s32.totalorder %s176, %s177
      %p189 = scmp.eq.s32.totalorder %s29, 7
      %p190 = por %p188, %p189
      %p192 = scmp.ne.s32.totalorder %s177, %s191
      %p193 = scmp.eq.s32.totalorder %s29, 0
      %p194 = por %p192, %p193
      %s195 = ssub.s32 %s31, %s38
      %p196 = scmp.eq.s32.totalorder %s195, 0
      %s198 = sadd.s32 %s197, 1
      %s199 = scalar_select %p196, %s197, %s198
      %p202 = pneg %p196
      %p203 = scmp.eq.s32.totalorder %s23, 7
      %p204 = por %p202, %p203
      %p205 = scmp.ne.s32.totalorder %s197, %s200
      %p206 = scmp.eq.s32.totalorder %s23, 0
      %p207 = por %p205, %p206
      %p208 = scmp.ne.s32.totalorder %s197, %s200
      %p209 = scmp.eq.s32.totalorder %s28, 7
      %p210 = por %p208, %p209
      %p211 = scmp.ne.s32.totalorder %s200, %s201
      %p212 = scmp.eq.s32.totalorder %s28, 0
      %p213 = por %p211, %p212
      %p214 = scmp.ne.s32.totalorder %s200, %s201
      %p215 = scmp.eq.s32.totalorder %s29, 7
      %p216 = por %p214, %p215
      %p218 = scmp.ne.s32.totalorder %s201, %s217
      %p219 = scmp.eq.s32.totalorder %s29, 0
      %p220 = por %p218, %p219
      %s221 = ssub.s32 %s31, %s38
      %p222 = scmp.eq.s32.totalorder %s221, 0
      %s224 = sadd.s32 %s223, 1
      %s225 = scalar_select %p222, %s223, %s224
      %p228 = pneg %p222
      %p229 = scmp.eq.s32.totalorder %s23, 7
      %p230 = por %p228, %p229
      %p231 = scmp.ne.s32.totalorder %s223, %s226
      %p232 = scmp.eq.s32.totalorder %s23, 0
      %p233 = por %p231, %p232
      %p234 = scmp.ne.s32.totalorder %s223, %s226
      %p235 = scmp.eq.s32.totalorder %s28, 7
      %p236 = por %p234, %p235
      %p237 = scmp.ne.s32.totalorder %s226, %s227
      %p238 = scmp.eq.s32.totalorder %s28, 0
      %p239 = por %p237, %p238
      %p240 = scmp.ne.s32.totalorder %s226, %s227
      %p241 = scmp.eq.s32.totalorder %s29, 7
      %p242 = por %p240, %p241
      %p244 = scmp.ne.s32.totalorder %s227, %s243
      %p245 = scmp.eq.s32.totalorder %s29, 0
      %p246 = por %p244, %p245
      %s247 = ssub.s32 %s30, %s42
      %s248 = ssub.s32 %s31, %s38
      %s249 = sor.u32 %s247, %s248
      %p250 = scmp.eq.s32.totalorder %s249, 0
      %s252 = sadd.s32 %s251, 1
      %s253 = scalar_select %p250, %s251, %s252
      %p256 = pneg %p250
      %p257 = scmp.eq.s32.totalorder %s23, 7
      %p258 = por %p256, %p257
      %p259 = scmp.ne.s32.totalorder %s251, %s254
      %p260 = scmp.eq.s32.totalorder %s23, 0
      %p261 = por %p259, %p260
      %p262 = scmp.ne.s32.totalorder %s251, %s254
      %p263 = scmp.eq.s32.totalorder %s28, 7
      %p264 = por %p262, %p263
      %p265 = scmp.ne.s32.totalorder %s254, %s255
      %p266 = scmp.eq.s32.totalorder %s28, 0
      %p267 = por %p265, %p266
      %p268 = scmp.ne.s32.totalorder %s254, %s255
      %p269 = scmp.eq.s32.totalorder %s29, 7
      %p270 = por %p268, %p269
      %p272 = scmp.ne.s32.totalorder %s255, %s271
      %p273 = scmp.eq.s32.totalorder %s29, 0
      %p274 = por %p272, %p273
      %p275 = scmp.le.s32.totalorder 1, %s23
      %p276 = scmp.lt.s32.totalorder %s23, 9
      %p277 = pnand %p275, %p276
      %p278 = pneg %p277
      // Predicated region
      $region9: #{tpu_custom_call.1} parent=5 // pred_check
        _
      $region10: #{tpu_custom_call.1} parent=5 // pred_check_branch
        %280 = sbr.rel (%p277) target = $region12
      $region11: #{tpu_custom_call.1} parent=5 // pred_region
        %s281 = ssub.s32 %s23, 1
        // Predicated region
        $region13: #{tpu_custom_call.1} parent=11 // pred_check
          %p282 = pneg %p82
        $region14: #{tpu_custom_call.1} parent=11 // pred_check_branch
          %284 = sbr.rel (%p282) target = $region16
        $region15: #{tpu_custom_call.1} parent=11 // pred_region
          %s286 = ssub.s32 4096, 4096
          %287 = vsyncadd [#allocation7], %s286
          %s288 = sshll.u32 [#allocation6], 4
          %s289 = int_to_ptr.vmem [resolvable:$true] %s288
          %294 = dma.hbm_to_vmem [thread:$0]  %s1, 4096, %s289, [#allocation7], 256, 256, 16
        $region16: #{tpu_custom_call.1} parent=11 // pred_fallthru
          _
        // Predicated region
        $region17: #{tpu_custom_call.1} parent=11 // pred_check
          %p295 = pneg %p103
        $region18: #{tpu_custom_call.1} parent=11 // pred_check_branch
          %297 = sbr.rel (%p295) target = $region20
        $region19: #{tpu_custom_call.1} parent=11 // pred_region
          _
        $region20: #{tpu_custom_call.1} parent=11 // pred_fallthru
          _
        // Predicated region
        $region21: #{tpu_custom_call.1} parent=11 // pred_check
          %p298 = pneg %p124
        $region22: #{tpu_custom_call.1} parent=11 // pred_check_branch
          %300 = sbr.rel (%p298) target = $region24
        $region23: #{tpu_custom_call.1} parent=11 // pred_region
          %s302 = ssub.s32 8192, 8192
          %303 = vsyncadd [#allocation7], %s302
          %s304 = sshll.u32 [#allocation8], 4
          %s305 = int_to_ptr.vmem [resolvable:$true] %s304
          %310 = dma.hbm_to_vmem [thread:$0]  %s3, 8192, %s305, [#allocation7], 256, 256, 16
        $region24: #{tpu_custom_call.1} parent=11 // pred_fallthru
          _
        // Predicated region
        $region25: #{tpu_custom_call.1} parent=11 // pred_check
          %p311 = pneg %p145
        $region26: #{tpu_custom_call.1} parent=11 // pred_check_branch
          %313 = sbr.rel (%p311) target = $region28
        $region27: #{tpu_custom_call.1} parent=11 // pred_region
          _
        $region28: #{tpu_custom_call.1} parent=11 // pred_fallthru
          _
        // Predicated region
        $region29: #{tpu_custom_call.1} parent=11 // pred_check
          %p314 = pneg %p166
        $region30: #{tpu_custom_call.1} parent=11 // pred_check_branch
          %316 = sbr.rel (%p314) target = $region32
        $region31: #{tpu_custom_call.1} parent=11 // pred_region
          %s318 = ssub.s32 4096, 4096
          %319 = vsyncadd [#allocation10], %s318
          %s320 = sshll.u32 [#allocation9], 4
          %s321 = int_to_ptr.vmem [resolvable:$true] %s320
          %326 = dma.hbm_to_vmem [thread:$0]  %s5, 4096, %s321, [#allocation10], 128, 128, 8
        $region32: #{tpu_custom_call.1} parent=11 // pred_fallthru
          _
        // Predicated region
        $region33: #{tpu_custom_call.1} parent=11 // pred_check
          %p327 = pneg %p187
        $region34: #{tpu_custom_call.1} parent=11 // pred_check_branch
          %329 = sbr.rel (%p327) target = $region36
        $region35: #{tpu_custom_call.1} parent=11 // pred_region
          _
        $region36: #{tpu_custom_call.1} parent=11 // pred_fallthru
          _
      $region12: #{tpu_custom_call.1} parent=5 // pred_fallthru
        _
      %p330 = scmp.lt.s32.totalorder %s23, 8
      // Predicated region
      $region37: #{tpu_custom_call.1} parent=5 // pred_check
        %p331 = pneg %p330
      $region38: #{tpu_custom_call.1} parent=5 // pred_check_branch
        %333 = sbr.rel (%p331) target = $region40
      $region39: #{tpu_custom_call.1} parent=5 // pred_region
        // Predicated region
        $region41: #{tpu_custom_call.1} parent=39 // pred_check
          %p334 = pneg %p55
        $region42: #{tpu_custom_call.1} parent=39 // pred_check_branch
          %336 = sbr.rel (%p334) target = $region44
        $region43: #{tpu_custom_call.1} parent=39 // pred_region
          %s337 = sand.u32 %s23, 1
          %s338 = scalar_lea.sflag [#allocation4], %s337
          %s339 = sand.u32 %s45, 1
          %s340 = smul.addr %s339, 8
          %s341 = scalar_lea.vmem [#allocation3], %s340
          %s343 = ssub.s32 128, 128
          %344 = vsyncadd %s338, %s343
          %s345 = smul.addr %s30, 128
          %s346 = scalar_lea.hbm %s0, %s345
          %s348 = sshll.u32 %s341, 4
          %s349 = int_to_ptr.vmem [resolvable:$true] %s348
          %351 = dma.hbm_to_vmem [thread:$0]  %s346, 128, %s349, %s338
        $region44: #{tpu_custom_call.1} parent=39 // pred_fallthru
          _
        // Predicated region
        $region45: #{tpu_custom_call.1} parent=39 // pred_check
          %p352 = pneg %p207
        $region46: #{tpu_custom_call.1} parent=39 // pred_check_branch
          %354 = sbr.rel (%p352) target = $region48
        $region47: #{tpu_custom_call.1} parent=39 // pred_region
          %s355 = sand.u32 %s23, 1
          %s356 = scalar_lea.sflag [#allocation4], %s355
          %s357 = sand.u32 %s197, 1
          %s358 = smul.addr %s357, 128
          %s359 = scalar_lea.vmem [#allocation11], %s358
          %s361 = ssub.s32 2048, 2048
          %362 = vsyncadd %s356, %s361
          %s363 = smul.addr %s31, 128
          %s364 = scalar_lea.hbm %s7, %s363
          %s365 = sshll.u32 %s359, 4
          %s366 = int_to_ptr.vmem [resolvable:$true] %s365
          %371 = dma.hbm_to_vmem [thread:$0]  %s364, 2048, %s366, %s356, 512, 128, 8
        $region48: #{tpu_custom_call.1} parent=39 // pred_fallthru
          _
        // Predicated region
        $region49: #{tpu_custom_call.1} parent=39 // pred_check
          %p372 = pneg %p233
        $region50: #{tpu_custom_call.1} parent=39 // pred_check_branch
          %374 = sbr.rel (%p372) target = $region52
        $region51: #{tpu_custom_call.1} parent=39 // pred_region
          %p375 = scmp.lt.s32.totalorder %s31, 3
          %s376 = scalar_select %p375, %s31, 3
          %s377 = scalar_lea.vmem %s8, %s376
        $region52: #{tpu_custom_call.1} parent=39 // pred_fallthru
          _
      $region40: #{tpu_custom_call.1} parent=5 // pred_fallthru
        _
      %p378 = scmp.le.s32.totalorder 1, %s23
      %p379 = scmp.lt.s32.totalorder %s23, 9
      %p380 = pnand %p378, %p379
      %p381 = pneg %p380
      // Predicated region
      $region53: #{tpu_custom_call.1} parent=5 // pred_check
        _
      $region54: #{tpu_custom_call.1} parent=5 // pred_check_branch
        %383 = sbr.rel (%p380) target = $region56
      $region55: #{tpu_custom_call.1} parent=5 // pred_region
        %s384 = ssub.s32 %s23, 1
        %s385 = sand.u32 %s28, 1
        %s386 = scalar_lea.sflag [#allocation4], %s385
        %s387 = sand.u32 %s48, 1
        %s388 = smul.addr %s387, 8
        %s389 = scalar_lea.vmem [#allocation3], %s388
        // Predicated region
        $region57: #{tpu_custom_call.1} parent=55 // pred_check
          %p390 = pneg %p61
        $region58: #{tpu_custom_call.1} parent=55 // pred_check_branch
          %392 = sbr.rel (%p390) target = $region60
        $region59: #{tpu_custom_call.1} parent=55 // pred_region
          %393 = dma.done %s386, 128
        $region60: #{tpu_custom_call.1} parent=55 // pred_fallthru
          _
        // Predicated region
        $region61: #{tpu_custom_call.1} parent=55 // pred_check
          %p394 = pneg %p82
        $region62: #{tpu_custom_call.1} parent=55 // pred_check_branch
          %396 = sbr.rel (%p394) target = $region64
        $region63: #{tpu_custom_call.1} parent=55 // pred_region
          %397 = dma.done [#allocation7], 4096
        $region64: #{tpu_custom_call.1} parent=55 // pred_fallthru
          _
        // Predicated region
        $region65: #{tpu_custom_call.1} parent=55 // pred_check
          %p398 = pneg %p124
        $region66: #{tpu_custom_call.1} parent=55 // pred_check_branch
          %400 = sbr.rel (%p398) target = $region68
        $region67: #{tpu_custom_call.1} parent=55 // pred_region
          %401 = dma.done [#allocation7], 8192
        $region68: #{tpu_custom_call.1} parent=55 // pred_fallthru
          _
        // Predicated region
        $region69: #{tpu_custom_call.1} parent=55 // pred_check
          %p402 = pneg %p166
        $region70: #{tpu_custom_call.1} parent=55 // pred_check_branch
          %404 = sbr.rel (%p402) target = $region72
        $region71: #{tpu_custom_call.1} parent=55 // pred_region
          %405 = dma.done [#allocation10], 4096
        $region72: #{tpu_custom_call.1} parent=55 // pred_fallthru
          _
        %s406 = sand.u32 %s28, 1
        %s407 = scalar_lea.sflag [#allocation4], %s406
        %s408 = sand.u32 %s200, 1
        %s409 = smul.addr %s408, 128
        %s410 = scalar_lea.vmem [#allocation11], %s409
        // Predicated region
        $region73: #{tpu_custom_call.1} parent=55 // pred_check
          %p411 = pneg %p213
        $region74: #{tpu_custom_call.1} parent=55 // pred_check_branch
          %413 = sbr.rel (%p411) target = $region76
        $region75: #{tpu_custom_call.1} parent=55 // pred_region
          %414 = dma.done %s407, 2048
        $region76: #{tpu_custom_call.1} parent=55 // pred_fallthru
          _
        %s415 = sand.u32 %s28, 1
        %s416 = scalar_lea.sflag [#allocation4], %s415
        %s417 = sand.u32 %s48, 1
        %s418 = smul.addr %s417, 8
        %s419 = scalar_lea.vmem [#allocation3], %s418
        %p420 = pneg %p61
        %p421 = pneg %p58
        %p422 = pneg %p82
        %p423 = pneg %p79
        %p424 = pneg %p103
        %p425 = pneg %p100
        %p426 = pneg %p124
        %p427 = pneg %p121
        %p428 = pneg %p145
        %p429 = pneg %p142
        %p430 = pneg %p166
        %p431 = pneg %p163
        %p432 = pneg %p187
        %p433 = pneg %p184
        %s434 = sand.u32 %s28, 1
        %s435 = scalar_lea.sflag [#allocation4], %s434
        %s436 = sand.u32 %s200, 1
        %s437 = smul.addr %s436, 128
        %s438 = scalar_lea.vmem [#allocation11], %s437
        %p439 = pneg %p213
        %p440 = pneg %p210
        %p441 = scmp.lt.s32.totalorder %s33, 3
        %s442 = scalar_select %p441, %s33, 3
        %s443 = scalar_lea.vmem %s8, %s442
        %p444 = pneg %p239
        %p445 = pneg %p236
        %p446 = pneg %p267
        %p447 = pneg %p264
        %s448 = sand.u32 %s254, 1
        %s449 = scalar_lea.sflag [#allocation5], %s448
        %s450 = sand.u32 %s254, 1
        %s451 = smul.addr %s450, 8
        %s452 = scalar_lea.vmem [#allocation12], %s451
        %p453 = scmp.lt.s32.totalorder %s33, 3
        %s454 = scalar_select %p453, %s33, 3
        %s455 = scalar_lea.vmem %s8, %s454
        %p456 = scmp.eq.s32.totalorder %s33, 0
        // Predicated region
        $region77: #{tpu_custom_call.1} parent=55 // pred_check
          %p457 = pneg %p456
        $region78: #{tpu_custom_call.1} parent=55 // pred_check_branch
          %459 = sbr.rel (%p457) target = $region80
        $region79: #{tpu_custom_call.1} parent=55 // pred_region
          %v460 = vld [vmem:[%s389] sm:$0xff]
          %v461 = vld [vmem:[#allocation6] sm:$0xff]
          %v462 = vld [vmem:[#allocation6 + $0x8] sm:$0xff]
          %v463 = vld [vmem:[#allocation6 + $0x10] sm:$0xff]
          %v464 = vld [vmem:[#allocation6 + $0x18] sm:$0xff]
          %v465 = vld [vmem:[#allocation6 + $0x20] sm:$0xff]
          %v466 = vld [vmem:[#allocation6 + $0x28] sm:$0xff]
          %v467 = vld [vmem:[#allocation6 + $0x30] sm:$0xff]
          %v468 = vld [vmem:[#allocation6 + $0x38] sm:$0xff]
          %v469 = vld [vmem:[#allocation6 + $0x40] sm:$0xff]
          %v470 = vld [vmem:[#allocation6 + $0x48] sm:$0xff]
          %v471 = vld [vmem:[#allocation6 + $0x50] sm:$0xff]
          %v472 = vld [vmem:[#allocation6 + $0x58] sm:$0xff]
          %v473 = vld [vmem:[#allocation6 + $0x60] sm:$0xff]
          %v474 = vld [vmem:[#allocation6 + $0x68] sm:$0xff]
          %v475 = vld [vmem:[#allocation6 + $0x70] sm:$0xff]
          %v476 = vld [vmem:[#allocation6 + $0x78] sm:$0xff]
          %v477 = vld [vmem:[#allocation6 + $0x80] sm:$0xff]
          %v478 = vld [vmem:[#allocation6 + $0x88] sm:$0xff]
          %v479 = vld [vmem:[#allocation6 + $0x90] sm:$0xff]
          %v480 = vld [vmem:[#allocation6 + $0x98] sm:$0xff]
          %v481 = vld [vmem:[#allocation6 + $0xa0] sm:$0xff]
          %v482 = vld [vmem:[#allocation6 + $0xa8] sm:$0xff]
          %v483 = vld [vmem:[#allocation6 + $0xb0] sm:$0xff]
          %v484 = vld [vmem:[#allocation6 + $0xb8] sm:$0xff]
          %v485 = vld [vmem:[#allocation6 + $0xc0] sm:$0xff]
          %v486 = vld [vmem:[#allocation6 + $0xc8] sm:$0xff]
          %v487 = vld [vmem:[#allocation6 + $0xd0] sm:$0xff]
          %v488 = vld [vmem:[#allocation6 + $0xd8] sm:$0xff]
          %v489 = vld [vmem:[#allocation6 + $0xe0] sm:$0xff]
          %v490 = vld [vmem:[#allocation6 + $0xe8] sm:$0xff]
          %v491 = vld [vmem:[#allocation6 + $0xf0] sm:$0xff]
          %v492 = vld [vmem:[#allocation6 + $0xf8] sm:$0xff]
          %v493 = vld [vmem:[%s2] sm:$0x3]
          %v495 = vlaneseq
          %v496 = vshrl.u32 %v495, 7
          %v497 = vsub.s32 0, %v496
          %v498 = vrot.slane %v493, %v497
          %v499 = vlaneseq
          %v500 = vshrl.u32 %v499, 7
          %v501 = vsub.s32 1, %v500
          %v502 = vrot.slane %v493, %v501
          %505 = vmatprep.subr.mxu0 %v462
          %506 = vmatpush1.msra.mxu0 %v461
          %507 = vmatprep.subr.mxu0 %v464
          %508 = vmatpush1.msra.mxu0 %v463
          %509 = vmatprep.subr.mxu0 %v466
          %510 = vmatpush1.msra.mxu0 %v465
          %511 = vmatprep.subr.mxu0 %v468
          %512 = vmatpush1.msra.mxu0 %v467
          %513 = vmatprep.subr.mxu0 %v470
          %514 = vmatpush1.msra.mxu0 %v469
          %515 = vmatprep.subr.mxu0 %v472
          %516 = vmatpush1.msra.mxu0 %v471
          %517 = vmatprep.subr.mxu0 %v474
          %518 = vmatpush1.msra.mxu0 %v473
          %519 = vmatprep.subr.mxu0 %v476
          %520 = vmatpush1.msra.mxu0 %v475
          %521 = vmatprep.subr.mxu0 %v478
          %522 = vmatpush1.msra.mxu0 %v477
          %523 = vmatprep.subr.mxu0 %v480
          %524 = vmatpush1.msra.mxu0 %v479
          %525 = vmatprep.subr.mxu0 %v482
          %526 = vmatpush1.msra.mxu0 %v481
          %527 = vmatprep.subr.mxu0 %v484
          %528 = vmatpush1.msra.mxu0 %v483
          %529 = vmatprep.subr.mxu0 %v486
          %530 = vmatpush1.msra.mxu0 %v485
          %531 = vmatprep.subr.mxu0 %v488
          %532 = vmatpush1.msra.mxu0 %v487
          %533 = vmatprep.subr.mxu0 %v490
          %534 = vmatpush1.msra.mxu0 %v489
          %535 = vmatprep.subr.mxu0 %v492
          %536 = vmatpush1.msra.mxu0 %v491
          %537 = vmatprep.subr.mxu0 0.0
          %538 = vmatpush1.msra.mxu0 0.0
          %539 = vmatprep.subr.mxu0 0.0
          %540 = vmatpush1.msra.mxu0 0.0
          %541 = vmatprep.subr.mxu0 0.0
          %542 = vmatpush1.msra.mxu0 0.0
          %543 = vmatprep.subr.mxu0 0.0
          %544 = vmatpush1.msra.mxu0 0.0
          %545 = vmatprep.subr.mxu0 0.0
          %546 = vmatpush1.msra.mxu0 0.0
          %547 = vmatprep.subr.mxu0 0.0
          %548 = vmatpush1.msra.mxu0 0.0
          %549 = vmatprep.subr.mxu0 0.0
          %550 = vmatpush1.msra.mxu0 0.0
          %551 = vmatprep.subr.mxu0 0.0
          %552 = vmatpush1.msra.mxu0 0.0
          %553 = vmatprep.subr.mxu0 0.0
          %554 = vmatpush1.msra.mxu0 0.0
          %555 = vmatprep.subr.mxu0 0.0
          %556 = vmatpush1.msra.mxu0 0.0
          %557 = vmatprep.subr.mxu0 0.0
          %558 = vmatpush1.msra.mxu0 0.0
          %559 = vmatprep.subr.mxu0 0.0
          %560 = vmatpush1.msra.mxu0 0.0
          %561 = vmatprep.subr.mxu0 0.0
          %562 = vmatpush1.msra.mxu0 0.0
          %563 = vmatprep.subr.mxu0 0.0
          %564 = vmatpush1.msra.mxu0 0.0
          %565 = vmatprep.subr.mxu0 0.0
          %566 = vmatpush1.msra.mxu0 0.0
          %567 = vmatprep.subr.mxu0 0.0
          %568 = vmatpush1.msra.mxu0 0.0
          %569 = vmatprep.mubr.f32.mxu0 0.0
          %570 = vmatmul.mubr.f32.gmra.mrb[0].mxu0 %v460
          %v571 = vpop.f32.mrb[0].mxu0
          %v572 = vadd.f32 %v498, %v571
          %v573 = vpop.f32.mrb[0].mxu0
          %v574 = vadd.f32 %v502, %v573
          %575 = vdwg.mxu0
          %v576 = vmul.f32 %v572, 0.5
          %v577 = vmul.f32 %v574, 0.5
          %v578 = vmul.f32 %v572, 0.70710677
          %v579 = vmul.f32 %v574, 0.70710677
          %v580 = verf.f32.pop %v578
          %v581 = verf.f32.pop %v579
          %v582 = vadd.f32 %v580, 1.0
          %v583 = vadd.f32 %v581, 1.0
          %v584 = vmul.f32 %v576, %v582
          %v585 = vmul.f32 %v577, %v583
          %v586 = vld [vmem:[#allocation8] sm:$0xff]
          %v587 = vld [vmem:[#allocation8 + $0x8] sm:$0xff]
          %v588 = vld [vmem:[#allocation8 + $0x10] sm:$0xff]
          %v589 = vld [vmem:[#allocation8 + $0x18] sm:$0xff]
          %v590 = vld [vmem:[#allocation8 + $0x20] sm:$0xff]
          %v591 = vld [vmem:[#allocation8 + $0x28] sm:$0xff]
          %v592 = vld [vmem:[#allocation8 + $0x30] sm:$0xff]
          %v593 = vld [vmem:[#allocation8 + $0x38] sm:$0xff]
          %v594 = vld [vmem:[#allocation8 + $0x40] sm:$0xff]
          %v595 = vld [vmem:[#allocation8 + $0x48] sm:$0xff]
          %v596 = vld [vmem:[#allocation8 + $0x50] sm:$0xff]
          %v597 = vld [vmem:[#allocation8 + $0x58] sm:$0xff]
          %v598 = vld [vmem:[#allocation8 + $0x60] sm:$0xff]
          %v599 = vld [vmem:[#allocation8 + $0x68] sm:$0xff]
          %v600 = vld [vmem:[#allocation8 + $0x70] sm:$0xff]
          %v601 = vld [vmem:[#allocation8 + $0x78] sm:$0xff]
          %v602 = vld [vmem:[#allocation8 + $0x80] sm:$0xff]
          %v603 = vld [vmem:[#allocation8 + $0x88] sm:$0xff]
          %v604 = vld [vmem:[#allocation8 + $0x90] sm:$0xff]
          %v605 = vld [vmem:[#allocation8 + $0x98] sm:$0xff]
          %v606 = vld [vmem:[#allocation8 + $0xa0] sm:$0xff]
          %v607 = vld [vmem:[#allocation8 + $0xa8] sm:$0xff]
          %v608 = vld [vmem:[#allocation8 + $0xb0] sm:$0xff]
          %v609 = vld [vmem:[#allocation8 + $0xb8] sm:$0xff]
          %v610 = vld [vmem:[#allocation8 + $0xc0] sm:$0xff]
          %v611 = vld [vmem:[#allocation8 + $0xc8] sm:$0xff]
          %v612 = vld [vmem:[#allocation8 + $0xd0] sm:$0xff]
          %v613 = vld [vmem:[#allocation8 + $0xd8] sm:$0xff]
          %v614 = vld [vmem:[#allocation8 + $0xe0] sm:$0xff]
          %v615 = vld [vmem:[#allocation8 + $0xe8] sm:$0xff]
          %v616 = vld [vmem:[#allocation8 + $0xf0] sm:$0xff]
          %v617 = vld [vmem:[#allocation8 + $0xf8] sm:$0xff]
          %v618 = vld [vmem:[#allocation8 + $0x100] sm:$0xff]
          %v619 = vld [vmem:[#allocation8 + $0x108] sm:$0xff]
          %v620 = vld [vmem:[#allocation8 + $0x110] sm:$0xff]
          %v621 = vld [vmem:[#allocation8 + $0x118] sm:$0xff]
          %v622 = vld [vmem:[#allocation8 + $0x120] sm:$0xff]
          %v623 = vld [vmem:[#allocation8 + $0x128] sm:$0xff]
          %v624 = vld [vmem:[#allocation8 + $0x130] sm:$0xff]
          %v625 = vld [vmem:[#allocation8 + $0x138] sm:$0xff]
          %v626 = vld [vmem:[#allocation8 + $0x140] sm:$0xff]
          %v627 = vld [vmem:[#allocation8 + $0x148] sm:$0xff]
          %v628 = vld [vmem:[#allocation8 + $0x150] sm:$0xff]
          %v629 = vld [vmem:[#allocation8 + $0x158] sm:$0xff]
          %v630 = vld [vmem:[#allocation8 + $0x160] sm:$0xff]
          %v631 = vld [vmem:[#allocation8 + $0x168] sm:$0xff]
          %v632 = vld [vmem:[#allocation8 + $0x170] sm:$0xff]
          %v633 = vld [vmem:[#allocation8 + $0x178] sm:$0xff]
          %v634 = vld [vmem:[#allocation8 + $0x180] sm:$0xff]
          %v635 = vld [vmem:[#allocation8 + $0x188] sm:$0xff]
          %v636 = vld [vmem:[#allocation8 + $0x190] sm:$0xff]
          %v637 = vld [vmem:[#allocation8 + $0x198] sm:$0xff]
          %v638 = vld [vmem:[#allocation8 + $0x1a0] sm:$0xff]
          %v639 = vld [vmem:[#allocation8 + $0x1a8] sm:$0xff]
          %v640 = vld [vmem:[#allocation8 + $0x1b0] sm:$0xff]
          %v641 = vld [vmem:[#allocation8 + $0x1b8] sm:$0xff]
          %v642 = vld [vmem:[#allocation8 + $0x1c0] sm:$0xff]
          %v643 = vld [vmem:[#allocation8 + $0x1c8] sm:$0xff]
          %v644 = vld [vmem:[#allocation8 + $0x1d0] sm:$0xff]
          %v645 = vld [vmem:[#allocation8 + $0x1d8] sm:$0xff]
          %v646 = vld [vmem:[#allocation8 + $0x1e0] sm:$0xff]
          %v647 = vld [vmem:[#allocation8 + $0x1e8] sm:$0xff]
          %v648 = vld [vmem:[#allocation8 + $0x1f0] sm:$0xff]
          %v649 = vld [vmem:[#allocation8 + $0x1f8] sm:$0xff]
          %v650 = vld [vmem:[%s4] sm:$0x3]
          %v652 = vlaneseq
          %v653 = vshrl.u32 %v652, 7
          %v654 = vsub.s32 0, %v653
          %v655 = vrot.slane %v650, %v654
          %v656 = vlaneseq
          %v657 = vshrl.u32 %v656, 7
          %v658 = vsub.s32 1, %v657
          %v659 = vrot.slane %v650, %v658
          %662 = vmatprep.subr.mxu0 %v587
          %663 = vmatpush1.msra.mxu0 %v586
          %664 = vmatprep.subr.mxu0 %v589
          %665 = vmatpush1.msra.mxu0 %v588
          %666 = vmatprep.subr.mxu0 %v591
          %667 = vmatpush1.msra.mxu0 %v590
          %668 = vmatprep.subr.mxu0 %v593
          %669 = vmatpush1.msra.mxu0 %v592
          %670 = vmatprep.subr.mxu0 %v595
          %671 = vmatpush1.msra.mxu0 %v594
          %672 = vmatprep.subr.mxu0 %v597
          %673 = vmatpush1.msra.mxu0 %v596
          %674 = vmatprep.subr.mxu0 %v599
          %675 = vmatpush1.msra.mxu0 %v598
          %676 = vmatprep.subr.mxu0 %v601
          %677 = vmatpush1.msra.mxu0 %v600
          %678 = vmatprep.subr.mxu0 %v603
          %679 = vmatpush1.msra.mxu0 %v602
          %680 = vmatprep.subr.mxu0 %v605
          %681 = vmatpush1.msra.mxu0 %v604
          %682 = vmatprep.subr.mxu0 %v607
          %683 = vmatpush1.msra.mxu0 %v606
          %684 = vmatprep.subr.mxu0 %v609
          %685 = vmatpush1.msra.mxu0 %v608
          %686 = vmatprep.subr.mxu0 %v611
          %687 = vmatpush1.msra.mxu0 %v610
          %688 = vmatprep.subr.mxu0 %v613
          %689 = vmatpush1.msra.mxu0 %v612
          %690 = vmatprep.subr.mxu0 %v615
          %691 = vmatpush1.msra.mxu0 %v614
          %692 = vmatprep.subr.mxu0 %v617
          %693 = vmatpush1.msra.mxu0 %v616
          %694 = vmatprep.subr.mxu0 %v619
          %695 = vmatpush1.msra.mxu0 %v618
          %696 = vmatprep.subr.mxu0 %v621
          %697 = vmatpush1.msra.mxu0 %v620
          %698 = vmatprep.subr.mxu0 %v623
          %699 = vmatpush1.msra.mxu0 %v622
          %700 = vmatprep.subr.mxu0 %v625
          %701 = vmatpush1.msra.mxu0 %v624
          %702 = vmatprep.subr.mxu0 %v627
          %703 = vmatpush1.msra.mxu0 %v626
          %704 = vmatprep.subr.mxu0 %v629
          %705 = vmatpush1.msra.mxu0 %v628
          %706 = vmatprep.subr.mxu0 %v631
          %707 = vmatpush1.msra.mxu0 %v630
          %708 = vmatprep.subr.mxu0 %v633
          %709 = vmatpush1.msra.mxu0 %v632
          %710 = vmatprep.subr.mxu0 %v635
          %711 = vmatpush1.msra.mxu0 %v634
          %712 = vmatprep.subr.mxu0 %v637
          %713 = vmatpush1.msra.mxu0 %v636
          %714 = vmatprep.subr.mxu0 %v639
          %715 = vmatpush1.msra.mxu0 %v638
          %716 = vmatprep.subr.mxu0 %v641
          %717 = vmatpush1.msra.mxu0 %v640
          %718 = vmatprep.subr.mxu0 %v643
          %719 = vmatpush1.msra.mxu0 %v642
          %720 = vmatprep.subr.mxu0 %v645
          %721 = vmatpush1.msra.mxu0 %v644
          %722 = vmatprep.subr.mxu0 %v647
          %723 = vmatpush1.msra.mxu0 %v646
          %724 = vmatprep.subr.mxu0 %v649
          %725 = vmatpush1.msra.mxu0 %v648
          %726 = vmatprep.mubr.f32.mxu0 %v585
          %727 = vmatmul.mubr.f32.gmra.mrb[0].mxu0 %v584
          %v728 = vpop.f32.mrb[0].mxu0
          %v729 = vadd.f32 %v655, %v728
          %v730 = vpop.f32.mrb[0].mxu0
          %v731 = vadd.f32 %v659, %v730
          %732 = vdwg.mxu0
          %v733 = vmul.f32 %v729, 0.5
          %v734 = vmul.f32 %v731, 0.5
          %v735 = vmul.f32 %v729, 0.70710677
          %v736 = vmul.f32 %v731, 0.70710677
          %v737 = verf.f32.pop %v735
          %v738 = verf.f32.pop %v736
          %v739 = vadd.f32 %v737, 1.0
          %v740 = vadd.f32 %v738, 1.0
          %v741 = vmul.f32 %v733, %v739
          %v742 = vmul.f32 %v734, %v740
          %v743 = vld [vmem:[#allocation9] sm:$0xff]
          %v744 = vld [vmem:[#allocation9 + $0x8] sm:$0xff]
          %v745 = vld [vmem:[#allocation9 + $0x10] sm:$0xff]
          %v746 = vld [vmem:[#allocation9 + $0x18] sm:$0xff]
          %v747 = vld [vmem:[#allocation9 + $0x20] sm:$0xff]
          %v748 = vld [vmem:[#allocation9 + $0x28] sm:$0xff]
          %v749 = vld [vmem:[#allocation9 + $0x30] sm:$0xff]
          %v750 = vld [vmem:[#allocation9 + $0x38] sm:$0xff]
          %v751 = vld [vmem:[#allocation9 + $0x40] sm:$0xff]
          %v752 = vld [vmem:[#allocation9 + $0x48] sm:$0xff]
          %v753 = vld [vmem:[#allocation9 + $0x50] sm:$0xff]
          %v754 = vld [vmem:[#allocation9 + $0x58] sm:$0xff]
          %v755 = vld [vmem:[#allocation9 + $0x60] sm:$0xff]
          %v756 = vld [vmem:[#allocation9 + $0x68] sm:$0xff]
          %v757 = vld [vmem:[#allocation9 + $0x70] sm:$0xff]
          %v758 = vld [vmem:[#allocation9 + $0x78] sm:$0xff]
          %v759 = vld [vmem:[#allocation9 + $0x80] sm:$0xff]
          %v760 = vld [vmem:[#allocation9 + $0x88] sm:$0xff]
          %v761 = vld [vmem:[#allocation9 + $0x90] sm:$0xff]
          %v762 = vld [vmem:[#allocation9 + $0x98] sm:$0xff]
          %v763 = vld [vmem:[#allocation9 + $0xa0] sm:$0xff]
          %v764 = vld [vmem:[#allocation9 + $0xa8] sm:$0xff]
          %v765 = vld [vmem:[#allocation9 + $0xb0] sm:$0xff]
          %v766 = vld [vmem:[#allocation9 + $0xb8] sm:$0xff]
          %v767 = vld [vmem:[#allocation9 + $0xc0] sm:$0xff]
          %v768 = vld [vmem:[#allocation9 + $0xc8] sm:$0xff]
          %v769 = vld [vmem:[#allocation9 + $0xd0] sm:$0xff]
          %v770 = vld [vmem:[#allocation9 + $0xd8] sm:$0xff]
          %v771 = vld [vmem:[#allocation9 + $0xe0] sm:$0xff]
          %v772 = vld [vmem:[#allocation9 + $0xe8] sm:$0xff]
          %v773 = vld [vmem:[#allocation9 + $0xf0] sm:$0xff]
          %v774 = vld [vmem:[#allocation9 + $0xf8] sm:$0xff]
          %v775 = vld [vmem:[%s6] sm:$0x1]
          %v777 = vlaneseq
          %v778 = vshrl.u32 %v777, 7
          %v779 = vsub.s32 0, %v778
          %v780 = vrot.slane %v775, %v779
          %782 = vmatprep.subr.mxu0 0.0
          %783 = vmatpush1.msra.mxu0 %v743
          %784 = vmatprep.subr.mxu0 0.0
          %785 = vmatpush1.msra.mxu0 %v744
          %786 = vmatprep.subr.mxu0 0.0
          %787 = vmatpush1.msra.mxu0 %v745
          %788 = vmatprep.subr.mxu0 0.0
          %789 = vmatpush1.msra.mxu0 %v746
          %790 = vmatprep.subr.mxu0 0.0
          %791 = vmatpush1.msra.mxu0 %v747
          %792 = vmatprep.subr.mxu0 0.0
          %793 = vmatpush1.msra.mxu0 %v748
          %794 = vmatprep.subr.mxu0 0.0
          %795 = vmatpush1.msra.mxu0 %v749
          %796 = vmatprep.subr.mxu0 0.0
          %797 = vmatpush1.msra.mxu0 %v750
          %798 = vmatprep.subr.mxu0 0.0
          %799 = vmatpush1.msra.mxu0 %v751
          %800 = vmatprep.subr.mxu0 0.0
          %801 = vmatpush1.msra.mxu0 %v752
          %802 = vmatprep.subr.mxu0 0.0
          %803 = vmatpush1.msra.mxu0 %v753
          %804 = vmatprep.subr.mxu0 0.0
          %805 = vmatpush1.msra.mxu0 %v754
          %806 = vmatprep.subr.mxu0 0.0
          %807 = vmatpush1.msra.mxu0 %v755
          %808 = vmatprep.subr.mxu0 0.0
          %809 = vmatpush1.msra.mxu0 %v756
          %810 = vmatprep.subr.mxu0 0.0
          %811 = vmatpush1.msra.mxu0 %v757
          %812 = vmatprep.subr.mxu0 0.0
          %813 = vmatpush1.msra.mxu0 %v758
          %814 = vmatprep.subr.mxu0 0.0
          %815 = vmatpush1.msra.mxu0 %v759
          %816 = vmatprep.subr.mxu0 0.0
          %817 = vmatpush1.msra.mxu0 %v760
          %818 = vmatprep.subr.mxu0 0.0
          %819 = vmatpush1.msra.mxu0 %v761
          %820 = vmatprep.subr.mxu0 0.0
          %821 = vmatpush1.msra.mxu0 %v762
          %822 = vmatprep.subr.mxu0 0.0
          %823 = vmatpush1.msra.mxu0 %v763
          %824 = vmatprep.subr.mxu0 0.0
          %825 = vmatpush1.msra.mxu0 %v764
          %826 = vmatprep.subr.mxu0 0.0
          %827 = vmatpush1.msra.mxu0 %v765
          %828 = vmatprep.subr.mxu0 0.0
          %829 = vmatpush1.msra.mxu0 %v766
          %830 = vmatprep.subr.mxu0 0.0
          %831 = vmatpush1.msra.mxu0 %v767
          %832 = vmatprep.subr.mxu0 0.0
          %833 = vmatpush1.msra.mxu0 %v768
          %834 = vmatprep.subr.mxu0 0.0
          %835 = vmatpush1.msra.mxu0 %v769
          %836 = vmatprep.subr.mxu0 0.0
          %837 = vmatpush1.msra.mxu0 %v770
          %838 = vmatprep.subr.mxu0 0.0
          %839 = vmatpush1.msra.mxu0 %v771
          %840 = vmatprep.subr.mxu0 0.0
          %841 = vmatpush1.msra.mxu0 %v772
          %842 = vmatprep.subr.mxu0 0.0
          %843 = vmatpush1.msra.mxu0 %v773
          %844 = vmatprep.subr.mxu0 0.0
          %845 = vmatpush1.msra.mxu0 %v774
          %846 = vmatprep.mubr.f32.mxu0 %v742
          %847 = vmatmul.mubr.f32.gmra.mrb[0].mxu0 %v741
          %v848 = vpop.f32.mrb[0].mxu0
          %v849 = vadd.f32 %v780, %v848
          %v850 = vpop.f32.mrb[0].mxu0
          %851 = vdwg.mxu0
          %v852 = vmul.f32 %v849, %v849
          %853 = vadd.xlane.f32.xlu0 %v852
          %v854 = vpop.xlane.xlu0 %853
          %v855 = vmax.f32 %v854, 1e-24
          %v856 = vrsqrt.pop %v855
          %v857 = vmul.f32 %v849, %v856
          %858 = vst [vmem:[#allocation2] sm:$0xff] %v857
        $region80: #{tpu_custom_call.1} parent=55 // pred_fallthru
          _
        %v859 = vld [vmem:[#allocation2] sm:$0xff]
        %v860 = vld [vmem:[%s410] sm:$0xff]
        %v861 = vld [vmem:[%s410 + $0x8] sm:$0xff]
        %v862 = vld [vmem:[%s410 + $0x10] sm:$0xff]
        %v863 = vld [vmem:[%s410 + $0x18] sm:$0xff]
        %v864 = vld [vmem:[%s410 + $0x20] sm:$0xff]
        %v865 = vld [vmem:[%s410 + $0x28] sm:$0xff]
        %v866 = vld [vmem:[%s410 + $0x30] sm:$0xff]
        %v867 = vld [vmem:[%s410 + $0x38] sm:$0xff]
        %v868 = vld [vmem:[%s410 + $0x40] sm:$0xff]
        %v869 = vld [vmem:[%s410 + $0x48] sm:$0xff]
        %v870 = vld [vmem:[%s410 + $0x50] sm:$0xff]
        %v871 = vld [vmem:[%s410 + $0x58] sm:$0xff]
        %v872 = vld [vmem:[%s410 + $0x60] sm:$0xff]
        %v873 = vld [vmem:[%s410 + $0x68] sm:$0xff]
        %v874 = vld [vmem:[%s410 + $0x70] sm:$0xff]
        %v875 = vld [vmem:[%s410 + $0x78] sm:$0xff]
        %876 = vmatprep.subr.mxu0 0.0
        %877 = vmatpush1.msra.mxu0 %v860
        %878 = vmatprep.subr.mxu0 0.0
        %879 = vmatpush1.msra.mxu0 %v861
        %880 = vmatprep.subr.mxu0 0.0
        %881 = vmatpush1.msra.mxu0 %v862
        %882 = vmatprep.subr.mxu0 0.0
        %883 = vmatpush1.msra.mxu0 %v863
        %884 = vmatprep.subr.mxu0 0.0
        %885 = vmatpush1.msra.mxu0 %v864
        %886 = vmatprep.subr.mxu0 0.0
        %887 = vmatpush1.msra.mxu0 %v865
        %888 = vmatprep.subr.mxu0 0.0
        %889 = vmatpush1.msra.mxu0 %v866
        %890 = vmatprep.subr.mxu0 0.0
        %891 = vmatpush1.msra.mxu0 %v867
        %892 = vmatprep.subr.mxu0 0.0
        %893 = vmatpush1.msra.mxu0 %v868
        %894 = vmatprep.subr.mxu0 0.0
        %895 = vmatpush1.msra.mxu0 %v869
        %896 = vmatprep.subr.mxu0 0.0
        %897 = vmatpush1.msra.mxu0 %v870
        %898 = vmatprep.subr.mxu0 0.0
        %899 = vmatpush1.msra.mxu0 %v871
        %900 = vmatprep.subr.mxu0 0.0
        %901 = vmatpush1.msra.mxu0 %v872
        %902 = vmatprep.subr.mxu0 0.0
        %903 = vmatpush1.msra.mxu0 %v873
        %904 = vmatprep.subr.mxu0 0.0
        %905 = vmatpush1.msra.mxu0 %v874
        %906 = vmatprep.subr.mxu0 0.0
        %907 = vmatpush1.msra.mxu0 %v875
        %908 = vmatprep.subr.mxu0 0.0
        %909 = vmatpush1.msra.mxu0 0.0
        %910 = vmatprep.subr.mxu0 0.0
        %911 = vmatpush1.msra.mxu0 0.0
        %912 = vmatprep.subr.mxu0 0.0
        %913 = vmatpush1.msra.mxu0 0.0
        %914 = vmatprep.subr.mxu0 0.0
        %915 = vmatpush1.msra.mxu0 0.0
        %916 = vmatprep.subr.mxu0 0.0
        %917 = vmatpush1.msra.mxu0 0.0
        %918 = vmatprep.subr.mxu0 0.0
        %919 = vmatpush1.msra.mxu0 0.0
        %920 = vmatprep.subr.mxu0 0.0
        %921 = vmatpush1.msra.mxu0 0.0
        %922 = vmatprep.subr.mxu0 0.0
        %923 = vmatpush1.msra.mxu0 0.0
        %924 = vmatprep.subr.mxu0 0.0
        %925 = vmatpush1.msra.mxu0 0.0
        %926 = vmatprep.subr.mxu0 0.0
        %927 = vmatpush1.msra.mxu0 0.0
        %928 = vmatprep.subr.mxu0 0.0
        %929 = vmatpush1.msra.mxu0 0.0
        %930 = vmatprep.subr.mxu0 0.0
        %931 = vmatpush1.msra.mxu0 0.0
        %932 = vmatprep.subr.mxu0 0.0
        %933 = vmatpush1.msra.mxu0 0.0
        %934 = vmatprep.subr.mxu0 0.0
        %935 = vmatpush1.msra.mxu0 0.0
        %936 = vmatprep.subr.mxu0 0.0
        %937 = vmatpush1.msra.mxu0 0.0
        %938 = vmatprep.subr.mxu0 0.0
        %939 = vmatpush1.msra.mxu0 0.0
        %940 = vmatprep.mubr.f32.mxu0 0.0
        %941 = vmatmul.mubr.f32.gmra.mrb[0].mxu0 %v859
        %v942 = vpop.f32.mrb[0].mxu0
        %v943 = vadd.f32 0.0, %v942
        %v944 = vpop.f32.mrb[0].mxu0
        %945 = vdwg.mxu0
        %v946 = vld [vmem:[%s455] sm:$0x1]
        %v948 = vlaneseq
        %v949 = vshrl.u32 %v948, 7
        %v950 = vsub.s32 0, %v949
        %v951 = vrot.slane %v946, %v950
        %v953 = vmul.f32 %v943, %v951
        %954 = vst [vmem:[%s452] sm:$0xff] %v953
        %s955 = sand.u32 %s254, 1
        %s956 = scalar_lea.sflag [#allocation5], %s955
        %s957 = sand.u32 %s254, 1
        %s958 = smul.addr %s957, 8
        %s959 = scalar_lea.vmem [#allocation12], %s958
        // Predicated region
        $region81: #{tpu_custom_call.1} parent=55 // pred_check
          %p960 = pneg %p264
        $region82: #{tpu_custom_call.1} parent=55 // pred_check_branch
          %962 = sbr.rel (%p960) target = $region84
        $region83: #{tpu_custom_call.1} parent=55 // pred_region
          %s964 = ssub.s32 128, 128
          %965 = vsyncadd %s956, %s964
          %s966 = smul.addr %s32, 4
          %s967 = sadd.s32 %s33, %s966
          %s968 = smul.addr %s967, 128
          %s969 = scalar_lea.hbm %s9, %s968
          %s971 = sshll.u32 %s959, 4
          %s972 = int_to_ptr.vmem [resolvable:$true] %s971
          %974 = dma.vmem_to_hbm [thread:$0]  %s972, 128, %s969, %s956
        $region84: #{tpu_custom_call.1} parent=55 // pred_fallthru
          _
      $region56: #{tpu_custom_call.1} parent=5 // pred_fallthru
        _
      %p975 = scmp.le.s32.totalorder 2, %s23
      // Predicated region
      $region85: #{tpu_custom_call.1} parent=5 // pred_check
        %p976 = pneg %p975
      $region86: #{tpu_custom_call.1} parent=5 // pred_check_branch
        %978 = sbr.rel (%p976) target = $region88
      $region87: #{tpu_custom_call.1} parent=5 // pred_region
        %s979 = ssub.s32 %s23, 2
        // Predicated region
        $region89: #{tpu_custom_call.1} parent=87 // pred_check
          %p980 = pneg %p270
        $region90: #{tpu_custom_call.1} parent=87 // pred_check_branch
          %982 = sbr.rel (%p980) target = $region92
        $region91: #{tpu_custom_call.1} parent=87 // pred_region
          %s983 = sand.u32 %s255, 1
          %s984 = scalar_lea.sflag [#allocation5], %s983
          %s985 = sand.u32 %s255, 1
          %s986 = smul.addr %s985, 8
          %s987 = scalar_lea.vmem [#allocation12], %s986
          %988 = dma.done %s984, 128
        $region92: #{tpu_custom_call.1} parent=87 // pred_fallthru
          _
      $region88: #{tpu_custom_call.1} parent=5 // pred_fallthru
        _
    $region6: #{tpu_custom_call.1} parent=1 // loop_footer
      %s27 = sadd.s32 1, %s23
    $region7: #{tpu_custom_call.1} parent=1 // loop_footer_branch
      %22 = sbr.rel target = $region3
    $region8: #{tpu_custom_call.1} parent=1 // loop_exit
      _
    %989 = vsyncpa [#allocation4], 1
    %s990 = scalar_lea.sflag [#allocation4], 1
    %991 = vsyncpa %s990, 1
    %992 = vsyncpa [#allocation7], 1
    %993 = vsyncpa [#allocation10], 1
    %994 = vsyncpa [#allocation5], 1
    %s995 = scalar_lea.sflag [#allocation5], 1
    %996 = vsyncpa %s995, 1

</llo_original>
